<compile_context>
chip_gen: v6e
topology: v6e:2x2x1
jax: 0.10.0
libtpu: 0.0.40
codegen_flags: <defaults>
</compile_context>

<pallas_src>
import jax
import jax.numpy as jnp
from jax import lax
from jax.experimental import pallas as pl
from jax.experimental.pallas import tpu as pltpu

LABELS = ['Geography', 'Entities', 'Time', 'Narrative', 'Overall', 'Style', 'Tone']
NUM_LABELS = len(LABELS)
NL_PAD = 8  # 7 heads + 1 zero row -> one sublane tile of head-major weight rows.


def _round_up(x, m):
    return (x + m - 1) // m * m


# ------------------------------- Pallas kernel --------------------------------
def heads_kernel(pooled_ref, doc_ref, img1_ref, img2_ref,
                 w_pool_ref, w_doc_ref, w_img1_ref, w_img2_ref, b_ref, o_ref):
    """Fused 7-head linear over the (implicitly) concatenated features.

    Grid = (batch tiles, doc-feature tiles).  The output block is resident
    across the reduction (k) axis and accumulated in place (no scratch).
    All weight slabs are fully VMEM-resident (constant index_map).
    """
    k = pl.program_id(1)
    tkd = doc_ref.shape[1]  # static doc-feature tile width

    def dot_t(x, w):
        # x[tm, c] . w[NL_PAD, c]^T -> [tm, NL_PAD]; f32 accumulation on the MXU.
        return lax.dot_general(
            x, w, dimension_numbers=(((1,), (1,)), ((), ())),
            preferred_element_type=jnp.float32)

    # Current doc-feature tile of the resident weight slab (static-size slice).
    off = k * tkd
    if tkd % 128 == 0:
        off = pl.multiple_of(off, 128)
    part = dot_t(doc_ref[...], w_doc_ref[:, pl.ds(off, tkd)])

    @pl.when(k == 0)
    def _():
        # Pooled / image segments and the bias contribute exactly once per
        # batch tile; fused into the k == 0 initialization of the output block.
        o_ref[...] = (b_ref[...]
                      + dot_t(pooled_ref[...], w_pool_ref[...])
                      + dot_t(img1_ref[...], w_img1_ref[...])
                      + dot_t(img2_ref[...], w_img2_ref[...])
                      + part)

    @pl.when(k > 0)
    def _():
        o_ref[...] += part


def run_heads(pooled, doc_flat, img1, img2, w_pool, w_doc, w_img1, w_img2, bias,
              *, tm_default=256, tkd_default=4096):
    """Fused heads: [pooled|doc|img1|img2] @ W_heads + b -> [B, NUM_LABELS]."""
    B, H = pooled.shape
    Fd = doc_flat.shape[1]
    NLp = w_pool.shape[0]  # NL_PAD

    # ---- tile selection -------------------------------------------------------
    tm = min(tm_default, _round_up(B, 16))           # bf16 sublane tile = 16
    if tm > 16 and _round_up(B, tm) // tm < 2:
        # Prefer >= 2 batch tiles so both v7x TensorCores get work (no-op on
        # single-TC v5e/v6e, and a no-op for tiny batches).
        tm = max(16, _round_up((_round_up(B, 16) + 1) // 2, 16))
    Bp = _round_up(B, tm)

    tkd = min(tkd_default, _round_up(Fd, 128))       # lane tile = 128
    Fdp = _round_up(Fd, tkd)

    def pad_to(a, rows, cols, dt):
        a = a.astype(dt)
        if a.shape == (rows, cols):
            return a
        return jnp.pad(a, ((0, rows - a.shape[0]), (0, cols - a.shape[1])))

    # bf16 matmul operands (f32 accumulation in-kernel).  Pads are no-ops when
    # the shapes already divide the tiles; only the small batch pad remains here.
    pooled_p = pad_to(pooled, Bp, H, jnp.bfloat16)
    doc_p = pad_to(doc_flat, Bp, Fdp, jnp.bfloat16)
    img1_p = pad_to(img1, Bp, H, jnp.bfloat16)
    img2_p = pad_to(img2, Bp, H, jnp.bfloat16)
    w_doc_p = pad_to(w_doc, NLp, Fdp, jnp.bfloat16)

    grid = (Bp // tm, Fdp // tkd)

    out = pl.pallas_call(
        heads_kernel,
        out_shape=jax.ShapeDtypeStruct((Bp, NLp), jnp.float32),
        grid_spec=pltpu.PrefetchScalarGridSpec(
            num_scalar_prefetch=0,
            grid=grid,
            in_specs=[
                pl.BlockSpec((tm, H), lambda i, k: (i, 0)),     # pooled (per-i resident)
                pl.BlockSpec((tm, tkd), lambda i, k: (i, k)),   # doc stream (B x K)
                pl.BlockSpec((tm, H), lambda i, k: (i, 0)),     # image embedding 1
                pl.BlockSpec((tm, H), lambda i, k: (i, 0)),     # image embedding 2
                pl.BlockSpec((NLp, H), lambda i, k: (0, 0)),    # w_pool (resident)
                pl.BlockSpec((NLp, Fdp), lambda i, k: (0, 0)),  # w_doc  (resident, full F)
                pl.BlockSpec((NLp, H), lambda i, k: (0, 0)),    # w_img1 (resident)
                pl.BlockSpec((NLp, H), lambda i, k: (0, 0)),    # w_img2 (resident)
                pl.BlockSpec((1, NLp), lambda i, k: (0, 0)),    # bias   (resident)
            ],
            out_specs=pl.BlockSpec((tm, NLp), lambda i, k: (i, 0)),
        ),
        compiler_params=pltpu.CompilerParams(
            # Batch tiles independent -> megacore/dual-TC; K is the reduction axis.
            dimension_semantics=("parallel", "arbitrary"),
            vmem_limit_bytes=48 * 1024 * 1024,  # < 64 MiB v7x physical, > scoped defaults
        ),
        cost_estimate=pl.CostEstimate(
            flops=2 * Bp * (Fdp + 3 * H) * NLp,
            transcendentals=0,
            bytes_accessed=(Bp * (Fdp + 3 * H)) * 2      # bf16 activations
                           + NLp * (Fdp + 3 * H) * 2     # bf16 weights (once)
                           + Bp * NLp * 4 + NLp * 4,     # f32 out + bias
        ),
    )(pooled_p, doc_p, img1_p, img2_p, w_pool, w_doc_p, w_img1, w_img2, bias)
    return out[:B, :NUM_LABELS]


# ------------------------------ Model wrapper ----------------------------------
class BERTClassPallas:
    """JAX/Pallas re-implementation of BERTClass.forward (small synthetic shapes)."""

    def __init__(self, key, *, vocab=100, seq=8, hidden=32, channels=3):
        self.seq = seq
        self.hidden = hidden
        k = jax.random.split(key, 8)
        std = 0.02
        # TODO(synk): pretrained HuggingFace BERT backbone not reproduced; stand-in =
        #             token + token-type embeddings, pooler = tanh(Linear(doc[:,0])).
        self.tok_emb = std * jax.random.normal(k[0], (vocab, hidden), jnp.float32)
        self.type_emb = std * jax.random.normal(k[1], (2, hidden), jnp.float32)
        self.pool_w = std * jax.random.normal(k[2], (hidden, hidden), jnp.float32)
        self.pool_b = jnp.zeros((hidden,), jnp.float32)
        # TODO(synk): pretrained ViT backbone not reproduced; stand-in pooler =
        #             tanh(Linear(mean over spatial of NCHW image)).
        self.vit_w = std * jax.random.normal(k[3], (channels, hidden), jnp.float32)
        self.vit_b = jnp.zeros((hidden,), jnp.float32)

        # 7 classification heads (Linear(hidden*(seq+3), 1) each), fused into one
        # matmul.  Stored transposed, split by feature segment, zero-padded to
        # NL_PAD rows and pre-cast to bf16 ONCE at init (no per-call cast/pad).
        F = hidden * (seq + 3)
        heads_w = std * jax.random.normal(k[4], (F, NUM_LABELS), jnp.float32)
        heads_b = std * jax.random.normal(k[5], (NUM_LABELS,), jnp.float32)
        self.heads_w_f32 = heads_w          # kept only for the numeric reference check
        self.heads_b_f32 = heads_b

        def seg_t(w_seg):                   # [c, NL] f32 -> [NL_PAD, c] bf16
            wt = jnp.zeros((NL_PAD, w_seg.shape[0]), jnp.float32)
            wt = wt.at[:NUM_LABELS, :].set(w_seg.T)
            return wt.astype(jnp.bfloat16)

        H, S = hidden, seq
        self.w_pool = seg_t(heads_w[0:H])
        self.w_doc = seg_t(heads_w[H:H + S * H])
        self.w_img1 = seg_t(heads_w[H + S * H:2 * H + S * H])
        self.w_img2 = seg_t(heads_w[2 * H + S * H:3 * H + S * H])
        self.heads_b = jnp.zeros((1, NL_PAD), jnp.float32).at[0, :NUM_LABELS].set(heads_b)
        # image_projection1/2 exist in the PyTorch __init__ but are unused in forward.

    def __call__(self, ids, mask, image1, image2, top_image1, top_image2,
                 token_type_ids):
        B = ids.shape[0]
        # ---- BERT stand-in (plain JAX glue) ----
        doc = self.tok_emb[ids] + self.type_emb[token_type_ids]          # [B, SEQ, H]
        doc = doc * mask[..., None].astype(doc.dtype)
        pooled = jnp.tanh(doc[:, 0, :] @ self.pool_w + self.pool_b)      # [B, H]
        # TODO(synk): dropout(0.3) treated as eval-mode identity (no PRNG scaling).
        output = pooled
        # ---- ViT stand-in poolers (plain JAX glue); image1/image2 unused, as in torch ----
        def vit_pool(img_nchw):                                          # layout: NCHW
            feat = jnp.mean(img_nchw, axis=(2, 3))                       # [B, C]
            return jnp.tanh(feat @ self.vit_w + self.vit_b)              # [B, H]
        image_embeddings1 = vit_pool(top_image1)
        image_embeddings2 = vit_pool(top_image2)
        # ---- fused 7-head linear in the Pallas kernel ----
        # No explicit concat / pad of the big slab: the four segments go to the
        # kernel separately (bf16 casts fuse into their producers; the doc reshape
        # is a free contiguous view) and the kernel sums the per-segment
        # contractions — equivalent to torch.cat([...], 1).view(B, -1) @ W + b.
        logits = run_heads(
            output.astype(jnp.bfloat16),
            doc.reshape(B, -1).astype(jnp.bfloat16),
            image_embeddings1.astype(jnp.bfloat16),
            image_embeddings2.astype(jnp.bfloat16),
            self.w_pool, self.w_doc, self.w_img1, self.w_img2, self.heads_b)
        # Match the PyTorch return: list of 7 tensors of shape [B, 1].
        return [logits[:, i:i + 1] for i in range(NUM_LABELS)]


# ---------------------------------- main ----------------------------------------
if __name__ == "__main__":
    B, SEQ, H, C, IMG, VOCAB = 2, 8, 32, 3, 16, 100
    key = jax.random.PRNGKey(0)
    k_model, k_ids, k_i1, k_i2, k_t1, k_t2 = jax.random.split(key, 6)

    model = BERTClassPallas(k_model, vocab=VOCAB, seq=SEQ, hidden=H, channels=C)

    ids = jax.random.randint(k_ids, (B, SEQ), 0, VOCAB, dtype=jnp.int32)
    mask = jnp.ones((B, SEQ), jnp.int32)
    token_type_ids = jnp.zeros((B, SEQ), jnp.int32)
    image1 = jax.random.normal(k_i1, (B, C, IMG, IMG), jnp.float32)       # unused, as in torch
    image2 = jax.random.normal(k_i2, (B, C, IMG, IMG), jnp.float32)       # unused, as in torch
    top_image1 = jax.random.normal(k_t1, (B, C, IMG, IMG), jnp.float32)
    top_image2 = jax.random.normal(k_t2, (B, C, IMG, IMG), jnp.float32)

    outs = model(ids, mask, image1, image2, top_image1, top_image2, token_type_ids)
    outs = [jax.block_until_ready(o) for o in outs]
    assert len(outs) == NUM_LABELS and all(o.shape == (B, 1) for o in outs)

    # Cross-check the fused-head Pallas kernel against a plain-JAX reference that
    # materializes the concat exactly like torch.cat(..., 1).view(B, -1).
    doc = model.tok_emb[ids] + model.type_emb[token_type_ids]
    doc = doc * mask[..., None].astype(doc.dtype)
    pooled = jnp.tanh(doc[:, 0, :] @ model.pool_w + model.pool_b)
    ie1 = jnp.tanh(jnp.mean(top_image1, axis=(2, 3)) @ model.vit_w + model.vit_b)
    ie2 = jnp.tanh(jnp.mean(top_image2, axis=(2, 3)) @ model.vit_w + model.vit_b)
    x_ref = jnp.concatenate(
        [pooled[:, None, :], doc, ie1[:, None, :], ie2[:, None, :]], axis=1
    ).reshape(B, -1)
    ref = x_ref @ model.heads_w_f32 + model.heads_b_f32
    got = jnp.concatenate(outs, axis=1)
    err = jnp.max(jnp.abs(got - ref))
    assert jnp.allclose(got, ref, atol=2e-2, rtol=2e-2), f"max abs err {err}"  # bf16 ops, f32 accum

    print("KERNEL_OK")
</pallas_src>

<mosaic_0001>
module attributes {stable_mosaic.version = 11 : i64} {
  func.func @heads_kernel(%arg0: i32, %arg1: i32, %arg2: memref<16x32xbf16, #tpu.memory_space<vmem>>, %arg3: memref<16x256xbf16, #tpu.memory_space<vmem>>, %arg4: memref<16x32xbf16, #tpu.memory_space<vmem>>, %arg5: memref<16x32xbf16, #tpu.memory_space<vmem>>, %arg6: memref<8x32xbf16, #tpu.memory_space<vmem>>, %arg7: memref<8x256xbf16, #tpu.memory_space<vmem>>, %arg8: memref<8x32xbf16, #tpu.memory_space<vmem>>, %arg9: memref<8x32xbf16, #tpu.memory_space<vmem>>, %arg10: memref<1x8xf32, #tpu.memory_space<vmem>>, %arg11: memref<16x8xf32, #tpu.memory_space<vmem>>) attributes {dimension_semantics = [#tpu.dimension_semantics<parallel>, #tpu.dimension_semantics<arbitrary>], iteration_bounds = array<i64: 1, 1>, scalar_prefetch = 0 : i64, scratch_operands = 0 : i64, tpu.core_type = #tpu.core_type<tc>, window_params = [{transform_indices = @transform_0, window_bounds = array<i64: 16, 32>}, {transform_indices = @transform_1, window_bounds = array<i64: 16, 256>}, {transform_indices = @transform_2, window_bounds = array<i64: 16, 32>}, {transform_indices = @transform_3, window_bounds = array<i64: 16, 32>}, {pipeline_mode = #tpu.pipeline_mode<synchronous>, transform_indices = @transform_4, window_bounds = array<i64: 8, 32>}, {pipeline_mode = #tpu.pipeline_mode<synchronous>, transform_indices = @transform_5, window_bounds = array<i64: 8, 256>}, {pipeline_mode = #tpu.pipeline_mode<synchronous>, transform_indices = @transform_6, window_bounds = array<i64: 8, 32>}, {pipeline_mode = #tpu.pipeline_mode<synchronous>, transform_indices = @transform_7, window_bounds = array<i64: 8, 32>}, {pipeline_mode = #tpu.pipeline_mode<synchronous>, transform_indices = @transform_8, window_bounds = array<i64: 1, 8>}, {transform_indices = @transform_9, window_bounds = array<i64: 16, 8>}]} {
    %c256_i32 = arith.constant 256 : i32
    %0 = arith.muli %arg1, %c256_i32 : i32
    %1 = tpu.assume_multiple %0, 128 : i32
    %c0 = arith.constant 0 : index
    %c0_0 = arith.constant 0 : index
    %2 = vector.load %arg3[%c0, %c0_0] : memref<16x256xbf16, #tpu.memory_space<vmem>>, vector<16x256xbf16>
    %c0_1 = arith.constant 0 : index
    %3 = arith.index_cast %1 : i32 to index
    %4 = vector.load %arg7[%c0_1, %3] : memref<8x256xbf16, #tpu.memory_space<vmem>>, vector<8x256xbf16>
    %cst = arith.constant dense<0.000000e+00> : vector<16x8xf32>
    %5 = tpu.matmul %2, %4, %cst {dimension_numbers = #tpu.dot_dimension_numbers<[1], [1], [0], [0], [0, 0, 1, 0], [], []>} : vector<16x256xbf16>, vector<8x256xbf16>, vector<16x8xf32> -> vector<16x8xf32>
    %c0_i32 = arith.constant 0 : i32
    %6 = arith.cmpi eq, %arg1, %c0_i32 : i32
    %7 = arith.extui %6 : i1 to i32
    %c0_i32_2 = arith.constant 0 : i32
    %8 = arith.cmpi ne, %7, %c0_i32_2 : i32
    scf.if %8 {
      %c0_5 = arith.constant 0 : index
      %c0_6 = arith.constant 0 : index
      %12 = vector.load %arg10[%c0_5, %c0_6] : memref<1x8xf32, #tpu.memory_space<vmem>>, vector<1x8xf32>
      %c0_7 = arith.constant 0 : index
      %c0_8 = arith.constant 0 : index
      %13 = vector.load %arg2[%c0_7, %c0_8] : memref<16x32xbf16, #tpu.memory_space<vmem>>, vector<16x32xbf16>
      %c0_9 = arith.constant 0 : index
      %c0_10 = arith.constant 0 : index
      %14 = vector.load %arg6[%c0_9, %c0_10] : memref<8x32xbf16, #tpu.memory_space<vmem>>, vector<8x32xbf16>
      %cst_11 = arith.constant dense<0.000000e+00> : vector<16x8xf32>
      %15 = tpu.matmul %13, %14, %cst_11 {dimension_numbers = #tpu.dot_dimension_numbers<[1], [1], [0], [0], [0, 0, 1, 0], [], []>} : vector<16x32xbf16>, vector<8x32xbf16>, vector<16x8xf32> -> vector<16x8xf32>
      %16 = vector.broadcast %12 : vector<1x8xf32> to vector<16x8xf32>
      %17 = arith.addf %16, %15 : vector<16x8xf32>
      %c0_12 = arith.constant 0 : index
      %c0_13 = arith.constant 0 : index
      %18 = vector.load %arg4[%c0_12, %c0_13] : memref<16x32xbf16, #tpu.memory_space<vmem>>, vector<16x32xbf16>
      %c0_14 = arith.constant 0 : index
      %c0_15 = arith.constant 0 : index
      %19 = vector.load %arg8[%c0_14, %c0_15] : memref<8x32xbf16, #tpu.memory_space<vmem>>, vector<8x32xbf16>
      %cst_16 = arith.constant dense<0.000000e+00> : vector<16x8xf32>
      %20 = tpu.matmul %18, %19, %cst_16 {dimension_numbers = #tpu.dot_dimension_numbers<[1], [1], [0], [0], [0, 0, 1, 0], [], []>} : vector<16x32xbf16>, vector<8x32xbf16>, vector<16x8xf32> -> vector<16x8xf32>
      %21 = arith.addf %17, %20 : vector<16x8xf32>
      %c0_17 = arith.constant 0 : index
      %c0_18 = arith.constant 0 : index
      %22 = vector.load %arg5[%c0_17, %c0_18] : memref<16x32xbf16, #tpu.memory_space<vmem>>, vector<16x32xbf16>
      %c0_19 = arith.constant 0 : index
      %c0_20 = arith.constant 0 : index
      %23 = vector.load %arg9[%c0_19, %c0_20] : memref<8x32xbf16, #tpu.memory_space<vmem>>, vector<8x32xbf16>
      %cst_21 = arith.constant dense<0.000000e+00> : vector<16x8xf32>
      %24 = tpu.matmul %22, %23, %cst_21 {dimension_numbers = #tpu.dot_dimension_numbers<[1], [1], [0], [0], [0, 0, 1, 0], [], []>} : vector<16x32xbf16>, vector<8x32xbf16>, vector<16x8xf32> -> vector<16x8xf32>
      %25 = arith.addf %21, %24 : vector<16x8xf32>
      %26 = arith.addf %25, %5 : vector<16x8xf32>
      %c0_22 = arith.constant 0 : index
      %c0_23 = arith.constant 0 : index
      %27 = vector.load %arg11[%c0_22, %c0_23] : memref<16x8xf32, #tpu.memory_space<vmem>>, vector<16x8xf32>
      tpu.vector_store %arg11[%c0_22, %c0_23], %26 {strides = array<i32>} : memref<16x8xf32, #tpu.memory_space<vmem>>, vector<16x8xf32>,
    } else {
    }
    %c0_i32_3 = arith.constant 0 : i32
    %9 = arith.cmpi sgt, %arg1, %c0_i32_3 : i32
    %10 = arith.extui %9 : i1 to i32
    %c0_i32_4 = arith.constant 0 : i32
    %11 = arith.cmpi ne, %10, %c0_i32_4 : i32
    scf.if %11 {
      %c0_5 = arith.constant 0 : index
      %c0_6 = arith.constant 0 : index
      %12 = vector.load %arg11[%c0_5, %c0_6] : memref<16x8xf32, #tpu.memory_space<vmem>>, vector<16x8xf32>
      %13 = arith.addf %12, %5 : vector<16x8xf32>
      %c0_7 = arith.constant 0 : index
      %c0_8 = arith.constant 0 : index
      %14 = vector.load %arg11[%c0_7, %c0_8] : memref<16x8xf32, #tpu.memory_space<vmem>>, vector<16x8xf32>
      tpu.vector_store %arg11[%c0_7, %c0_8], %13 {strides = array<i32>} : memref<16x8xf32, #tpu.memory_space<vmem>>, vector<16x8xf32>,
    } else {
    }
    return
  }
  func.func @transform_0(%arg0: i32, %arg1: i32) -> (i32, i32) {
    %c0_i32 = arith.constant 0 : i32
    %c0_i32_0 = arith.constant 0 : i32
    return %arg0, %c0_i32 : i32, i32
  }
  func.func @transform_1(%arg0: i32, %arg1: i32) -> (i32, i32) {
    %c0_i32 = arith.constant 0 : i32
    return %arg0, %arg1 : i32, i32
  }
  func.func @transform_2(%arg0: i32, %arg1: i32) -> (i32, i32) {
    %c0_i32 = arith.constant 0 : i32
    %c0_i32_0 = arith.constant 0 : i32
    return %arg0, %c0_i32 : i32, i32
  }
  func.func @transform_3(%arg0: i32, %arg1: i32) -> (i32, i32) {
    %c0_i32 = arith.constant 0 : i32
    %c0_i32_0 = arith.constant 0 : i32
    return %arg0, %c0_i32 : i32, i32
  }
  func.func @transform_4(%arg0: i32, %arg1: i32) -> (i32, i32) {
    %c0_i32 = arith.constant 0 : i32
    %c0_i32_0 = arith.constant 0 : i32
    %c0_i32_1 = arith.constant 0 : i32
    return %c0_i32, %c0_i32_0 : i32, i32
  }
  func.func @transform_5(%arg0: i32, %arg1: i32) -> (i32, i32) {
    %c0_i32 = arith.constant 0 : i32
    %c0_i32_0 = arith.constant 0 : i32
    %c0_i32_1 = arith.constant 0 : i32
    return %c0_i32, %c0_i32_0 : i32, i32
  }
  func.func @transform_6(%arg0: i32, %arg1: i32) -> (i32, i32) {
    %c0_i32 = arith.constant 0 : i32
    %c0_i32_0 = arith.constant 0 : i32
    %c0_i32_1 = arith.constant 0 : i32
    return %c0_i32, %c0_i32_0 : i32, i32
  }
  func.func @transform_7(%arg0: i32, %arg1: i32) -> (i32, i32) {
    %c0_i32 = arith.constant 0 : i32
    %c0_i32_0 = arith.constant 0 : i32
    %c0_i32_1 = arith.constant 0 : i32
    return %c0_i32, %c0_i32_0 : i32, i32
  }
  func.func @transform_8(%arg0: i32, %arg1: i32) -> (i32, i32) {
    %c0_i32 = arith.constant 0 : i32
    %c0_i32_0 = arith.constant 0 : i32
    %c0_i32_1 = arith.constant 0 : i32
    return %c0_i32, %c0_i32_0 : i32, i32
  }
  func.func @transform_9(%arg0: i32, %arg1: i32) -> (i32, i32) {
    %c0_i32 = arith.constant 0 : i32
    %c0_i32_0 = arith.constant 0 : i32
    return %arg0, %c0_i32 : i32, i32
  }
}

</mosaic_0001>

<llo_original>
// kernel: tpu_custom_call.1
$region0: #{tpu_custom_call.1}
  #allocation0 [shape = 'u32[]', space=smem, size = 0x4, offset = 0x4, fixed_abs, tag = 'smem constant byte address 0x4 - core index']
  #allocation1 [shape = 'u32[144,128]{1,0:T(1,128)}', space=vmem, size = 0x12000, scoped, tag = 'internal scratch']
  %s0 = inlined_call_operand.hbm [shape: bf16[16,32], index: 0, kind: input, shape index: {}]
  %s1 = inlined_call_operand.hbm [shape: bf16[16,256], index: 1, kind: input, shape index: {}]
  %s2 = inlined_call_operand.hbm [shape: bf16[16,32], index: 2, kind: input, shape index: {}]
  %s3 = inlined_call_operand.hbm [shape: bf16[16,32], index: 3, kind: input, shape index: {}]
  %s4 = inlined_call_operand.hbm [shape: bf16[8,32], index: 4, kind: input, shape index: {}]
  %s5 = inlined_call_operand.vmem [shape: bf16[8,256], index: 5, kind: input, shape index: {}]
  %s6 = inlined_call_operand.hbm [shape: bf16[8,32], index: 6, kind: input, shape index: {}]
  %s7 = inlined_call_operand.vmem [shape: bf16[8,32], index: 7, kind: input, shape index: {}]
  %s8 = inlined_call_operand.vmem [shape: f32[1,8], index: 8, kind: input, shape index: {}]
  %s9 = inlined_call_operand.vmem [shape: f32[16,8], index: 9, kind: output, shape index: {}]
  %s10 = sld [smem:[#allocation0]]
  $region78: #{tpu_custom_call.1} parent=0
    _
  %s12 = ssub.s32 1, %s10
  %s13 = scalar_select 0, %s12, %s10
  $region1: #{tpu_custom_call.1} parent=0
    #allocation2 [shape = 'u8[4096]{0}', space=vmem, size = 0x1000, scoped, tag = 'input window, operand 0, single buffered']
    #allocation3 [shape = 's32[1]{0}', space=sflag, size = 0x4, scoped, tag = 'scoped memory for tpu_custom_call.1']
    #allocation4 [shape = 'u8[8192]{0}', space=vmem, size = 0x2000, scoped, tag = 'input window, operand 1, single buffered']
    #allocation5 [shape = 's32[1]{0}', space=sflag, size = 0x4, scoped, tag = 'scoped memory for tpu_custom_call.1']
    #allocation6 [shape = 'u8[4096]{0}', space=vmem, size = 0x1000, scoped, tag = 'input window, operand 2, single buffered']
    #allocation7 [shape = 'u8[4096]{0}', space=vmem, size = 0x1000, scoped, tag = 'input window, operand 3, single buffered']
    #allocation8 [shape = 's32[1]{0}', space=sflag, size = 0x4, scoped, tag = 'scoped memory for tpu_custom_call.1']
    #allocation9 [shape = 'u8[2048]{0}', space=vmem, size = 0x800, scoped, tag = 'input window, operand 4, single buffered']
    #allocation10 [shape = 'u8[2048]{0}', space=vmem, size = 0x800, scoped, tag = 'input window, operand 6, single buffered']
    #allocation11 [shape = 's32[1]{0}', space=sflag, size = 0x4, scoped, tag = 'scoped memory for tpu_custom_call.1']
    %14 = vsyncpa [#allocation3], 0
    %15 = vsyncpa [#allocation5], 0
    %16 = vsyncpa [#allocation8], 0
    %17 = vsyncpa [#allocation11], 0
    // Predicated region
    $region2: #{tpu_custom_call.1} parent=1 // pred_check
      _
    $region3: #{tpu_custom_call.1} parent=1 // pred_check_branch
      %19 = sbr.rel (0) target = $region5
    $region4: #{tpu_custom_call.1} parent=1 // pred_region
      %s21 = ssub.s32 128, 128
      %22 = vsyncadd [#allocation3], %s21
      %s23 = sshll.u32 [#allocation2], 4
      %s24 = int_to_ptr.vmem [resolvable:$true] %s23
      %29 = dma.hbm_to_vmem [thread:$0]  %s0, 128, %s24, [#allocation3], 64, 64, 4
    $region5: #{tpu_custom_call.1} parent=1 // pred_fallthru
      _
    // Predicated region
    $region6: #{tpu_custom_call.1} parent=1 // pred_check
      _
    $region7: #{tpu_custom_call.1} parent=1 // pred_check_branch
      %31 = sbr.rel (0) target = $region9
    $region8: #{tpu_custom_call.1} parent=1 // pred_region
      %s33 = ssub.s32 256, 256
      %34 = vsyncadd [#allocation5], %s33
      %s35 = sshll.u32 [#allocation4], 4
      %s36 = int_to_ptr.vmem [resolvable:$true] %s35
      %41 = dma.hbm_to_vmem [thread:$0]  %s1, 256, %s36, [#allocation5], 128, 128, 8
    $region9: #{tpu_custom_call.1} parent=1 // pred_fallthru
      _
    // Predicated region
    $region10: #{tpu_custom_call.1} parent=1 // pred_check
      _
    $region11: #{tpu_custom_call.1} parent=1 // pred_check_branch
      %43 = sbr.rel (0) target = $region13
    $region12: #{tpu_custom_call.1} parent=1 // pred_region
      %s45 = ssub.s32 128, 128
      %46 = vsyncadd [#allocation5], %s45
      %s47 = sshll.u32 [#allocation6], 4
      %s48 = int_to_ptr.vmem [resolvable:$true] %s47
      %53 = dma.hbm_to_vmem [thread:$0]  %s2, 128, %s48, [#allocation5], 64, 64, 4
    $region13: #{tpu_custom_call.1} parent=1 // pred_fallthru
      _
    // Predicated region
    $region14: #{tpu_custom_call.1} parent=1 // pred_check
      _
    $region15: #{tpu_custom_call.1} parent=1 // pred_check_branch
      %55 = sbr.rel (0) target = $region17
    $region16: #{tpu_custom_call.1} parent=1 // pred_region
      %s57 = ssub.s32 128, 128
      %58 = vsyncadd [#allocation8], %s57
      %s59 = sshll.u32 [#allocation7], 4
      %s60 = int_to_ptr.vmem [resolvable:$true] %s59
      %65 = dma.hbm_to_vmem [thread:$0]  %s3, 128, %s60, [#allocation8], 64, 64, 4
    $region17: #{tpu_custom_call.1} parent=1 // pred_fallthru
      _
    // Predicated region
    $region18: #{tpu_custom_call.1} parent=1 // pred_check
      _
    $region19: #{tpu_custom_call.1} parent=1 // pred_check_branch
      %67 = sbr.rel (0) target = $region21
    $region20: #{tpu_custom_call.1} parent=1 // pred_region
      %s69 = ssub.s32 64, 64
      %70 = vsyncadd [#allocation8], %s69
      %s72 = sshll.u32 [#allocation9], 4
      %s73 = int_to_ptr.vmem [resolvable:$true] %s72
      %75 = dma.hbm_to_vmem [thread:$0]  %s4, 64, %s73, [#allocation8]
    $region21: #{tpu_custom_call.1} parent=1 // pred_fallthru
      _
    // Predicated region
    $region22: #{tpu_custom_call.1} parent=1 // pred_check
      _
    $region23: #{tpu_custom_call.1} parent=1 // pred_check_branch
      %77 = sbr.rel (0) target = $region25
    $region24: #{tpu_custom_call.1} parent=1 // pred_region
      _
    $region25: #{tpu_custom_call.1} parent=1 // pred_fallthru
      _
    // Predicated region
    $region26: #{tpu_custom_call.1} parent=1 // pred_check
      _
    $region27: #{tpu_custom_call.1} parent=1 // pred_check_branch
      %79 = sbr.rel (0) target = $region29
    $region28: #{tpu_custom_call.1} parent=1 // pred_region
      %s81 = ssub.s32 64, 64
      %82 = vsyncadd [#allocation11], %s81
      %s84 = sshll.u32 [#allocation10], 4
      %s85 = int_to_ptr.vmem [resolvable:$true] %s84
      %87 = dma.hbm_to_vmem [thread:$0]  %s6, 64, %s85, [#allocation11]
    $region29: #{tpu_custom_call.1} parent=1 // pred_fallthru
      _
    // Predicated region
    $region30: #{tpu_custom_call.1} parent=1 // pred_check
      _
    $region31: #{tpu_custom_call.1} parent=1 // pred_check_branch
      %89 = sbr.rel (0) target = $region33
    $region32: #{tpu_custom_call.1} parent=1 // pred_region
      _
    $region33: #{tpu_custom_call.1} parent=1 // pred_fallthru
      _
    // Predicated region
    $region34: #{tpu_custom_call.1} parent=1 // pred_check
      _
    $region35: #{tpu_custom_call.1} parent=1 // pred_check_branch
      %91 = sbr.rel (0) target = $region37
    $region36: #{tpu_custom_call.1} parent=1 // pred_region
      _
    $region37: #{tpu_custom_call.1} parent=1 // pred_fallthru
      _
    // Predicated region
    $region38: #{tpu_custom_call.1} parent=1 // pred_check
      _
    $region39: #{tpu_custom_call.1} parent=1 // pred_check_branch
      %93 = sbr.rel (0) target = $region41
    $region40: #{tpu_custom_call.1} parent=1 // pred_region
      %94 = dma.done [#allocation3], 128
    $region41: #{tpu_custom_call.1} parent=1 // pred_fallthru
      _
    // Predicated region
    $region42: #{tpu_custom_call.1} parent=1 // pred_check
      _
    $region43: #{tpu_custom_call.1} parent=1 // pred_check_branch
      %96 = sbr.rel (0) target = $region45
    $region44: #{tpu_custom_call.1} parent=1 // pred_region
      %97 = dma.done [#allocation5], 256
    $region45: #{tpu_custom_call.1} parent=1 // pred_fallthru
      _
    // Predicated region
    $region46: #{tpu_custom_call.1} parent=1 // pred_check
      _
    $region47: #{tpu_custom_call.1} parent=1 // pred_check_branch
      %99 = sbr.rel (0) target = $region49
    $region48: #{tpu_custom_call.1} parent=1 // pred_region
      %100 = dma.done [#allocation5], 128
    $region49: #{tpu_custom_call.1} parent=1 // pred_fallthru
      _
    // Predicated region
    $region50: #{tpu_custom_call.1} parent=1 // pred_check
      _
    $region51: #{tpu_custom_call.1} parent=1 // pred_check_branch
      %102 = sbr.rel (0) target = $region53
    $region52: #{tpu_custom_call.1} parent=1 // pred_region
      %103 = dma.done [#allocation8], 128
    $region53: #{tpu_custom_call.1} parent=1 // pred_fallthru
      _
    // Predicated region
    $region54: #{tpu_custom_call.1} parent=1 // pred_check
      _
    $region55: #{tpu_custom_call.1} parent=1 // pred_check_branch
      %105 = sbr.rel (0) target = $region57
    $region56: #{tpu_custom_call.1} parent=1 // pred_region
      %106 = dma.done [#allocation8], 64
    $region57: #{tpu_custom_call.1} parent=1 // pred_fallthru
      _
    // Predicated region
    $region58: #{tpu_custom_call.1} parent=1 // pred_check
      _
    $region59: #{tpu_custom_call.1} parent=1 // pred_check_branch
      %108 = sbr.rel (0) target = $region61
    $region60: #{tpu_custom_call.1} parent=1 // pred_region
      %109 = dma.done [#allocation11], 64
    $region61: #{tpu_custom_call.1} parent=1 // pred_fallthru
      _
    %s111 = smul.u32 0, 256
    %v112 = vld [vmem:[#allocation4] sm:$0xff]
    %v113 = vld [vmem:[#allocation4 + $0x8] sm:$0xff]
    %s114 = sshra.s32 %s111, 7
    %s115 = sand.u32 %s111, 127
    %s116 = smul.addr %s114, 4
    %s117 = scalar_lea.vmem %s5, %s116
    %v118 = vld [vmem:[%s117] sm:$0xff]
    %v121 = vunpack.c.l.b16 %v112
    %v122 = vunpack.c.h.b16 %v112
    %v123 = vunpack.c.l.b16 %v113
    %v124 = vunpack.c.h.b16 %v113
    %v125 = vpack.c.b16 %v123, %v121
    %v126 = vpack.c.b16 %v124, %v122
    %v130 = vunpack.c.l.b16 %v118
    %v131 = vunpack.c.h.b16 %v118
    %v132 = vpack.c.b16 %v130, %v130
    %v133 = vpack.c.b16 %v131, %v131
    %136 = vmatprep.subr.bf16.mxu0 0
    %137 = vmatpush1.bf16.xpose.msra.mxu0 0
    %138 = vmatprep.subr.bf16.mxu0 0
    %139 = vmatpush1.bf16.xpose.msra.mxu0 0
    %140 = vmatprep.subr.bf16.mxu0 0
    %141 = vmatpush1.bf16.xpose.msra.mxu0 0
    %142 = vmatprep.subr.bf16.mxu0 0
    %143 = vmatpush1.bf16.xpose.msra.mxu0 0
    %144 = vmatprep.subr.bf16.mxu0 0
    %145 = vmatpush1.bf16.xpose.msra.mxu0 0
    %146 = vmatprep.subr.bf16.mxu0 0
    %147 = vmatpush1.bf16.xpose.msra.mxu0 0
    %148 = vmatprep.subr.bf16.mxu0 0
    %149 = vmatpush1.bf16.xpose.msra.mxu0 0
    %150 = vmatprep.subr.bf16.mxu0 %v133
    %151 = vmatpush1.bf16.xpose.msra.mxu0 %v132
    %152 = vmatprep.subr.bf16.mxu0 0
    %153 = vmatpush2.bf16.xpose.msra.mxu0 0
    %154 = vmatprep.subr.bf16.mxu0 0
    %155 = vmatpush2.bf16.xpose.msra.mxu0 0
    %156 = vmatprep.subr.bf16.mxu0 0
    %157 = vmatpush2.bf16.xpose.msra.mxu0 0
    %158 = vmatprep.subr.bf16.mxu0 0
    %159 = vmatpush2.bf16.xpose.msra.mxu0 0
    %160 = vmatprep.subr.bf16.mxu0 0
    %161 = vmatpush2.bf16.xpose.msra.mxu0 0
    %162 = vmatprep.subr.bf16.mxu0 0
    %163 = vmatpush2.bf16.xpose.msra.mxu0 0
    %164 = vmatprep.subr.bf16.mxu0 0
    %165 = vmatpush2.bf16.xpose.msra.mxu0 0
    %166 = vmatprep.subr.bf16.mxu0 0
    %167 = vmatpush2.bf16.xpose.msra.mxu0 0
    %168 = vmatprep.mubr.bf16.mxu0 %v126
    %169 = vmatmul.mubr.bf16.gmra.mxu0 %v125
    %v170 = vpop.f32.mrf.mxu0
    %v171 = vadd.f32 0.0, %v170
    %v172 = vpop.f32.mrf.mxu0
    %v173 = vpop.f32.mrf.mxu0
    %v174 = vadd.f32 0.0, %v173
    %v175 = vpop.f32.mrf.mxu0
    %176 = vdwg.mxu0
    %p177 = scmp.eq.s32.totalorder 0, 0
    // Predicated region
    $region62: #{tpu_custom_call.1} parent=1 // pred_check
      %p178 = pneg %p177
    $region63: #{tpu_custom_call.1} parent=1 // pred_check_branch
      %180 = sbr.rel (%p178) target = $region65
    $region64: #{tpu_custom_call.1} parent=1 // pred_region
      %v181 = vld [vmem:[%s8] sm:$0x1]
      %v182 = vld [vmem:[#allocation2] sm:$0xf]
      %v183 = vld [vmem:[#allocation2 + $0x4] sm:$0xf]
      %v184 = vld [vmem:[#allocation9] sm:$0xf]
      %v187 = vunpack.c.l.b16 %v182
      %v188 = vunpack.c.l.b16 %v183
      %v189 = vpack.c.b16 %v188, %v187
      %vm190 = vcmask 261120
      %v192 = vsel %vm190, %v189, 0
      %v195 = vsel %vm190, %v184, 0
      %197 = vmatprep.subr.bf16.mxu0 0
      %198 = vmatpush1.bf16.xpose.msra.mxu0 0
      %199 = vmatprep.subr.bf16.mxu0 0
      %200 = vmatpush1.bf16.xpose.msra.mxu0 0
      %201 = vmatprep.subr.bf16.mxu0 0
      %202 = vmatpush1.bf16.xpose.msra.mxu0 0
      %203 = vmatprep.subr.bf16.mxu0 0
      %204 = vmatpush1.bf16.xpose.msra.mxu0 0
      %205 = vmatprep.subr.bf16.mxu0 0
      %206 = vmatpush1.bf16.xpose.msra.mxu0 0
      %207 = vmatprep.subr.bf16.mxu0 0
      %208 = vmatpush1.bf16.xpose.msra.mxu0 0
      %209 = vmatprep.subr.bf16.mxu0 0
      %210 = vmatpush1.bf16.xpose.msra.mxu0 0
      %211 = vmatprep.subr.bf16.mxu0 0
      %212 = vmatpush1.bf16.xpose.msra.mxu0 %v195
      %213 = vmatprep.subr.bf16.mxu0 0
      %214 = vmatpush2.bf16.xpose.msra.mxu0 0
      %215 = vmatprep.subr.bf16.mxu0 0
      %216 = vmatpush2.bf16.xpose.msra.mxu0 0
      %217 = vmatprep.subr.bf16.mxu0 0
      %218 = vmatpush2.bf16.xpose.msra.mxu0 0
      %219 = vmatprep.subr.bf16.mxu0 0
      %220 = vmatpush2.bf16.xpose.msra.mxu0 0
      %221 = vmatprep.subr.bf16.mxu0 0
      %222 = vmatpush2.bf16.xpose.msra.mxu0 0
      %223 = vmatprep.subr.bf16.mxu0 0
      %224 = vmatpush2.bf16.xpose.msra.mxu0 0
      %225 = vmatprep.subr.bf16.mxu0 0
      %226 = vmatpush2.bf16.xpose.msra.mxu0 0
      %227 = vmatprep.subr.bf16.mxu0 0
      %228 = vmatpush2.bf16.xpose.msra.mxu0 0
      %229 = vmatprep.mubr.bf16.mxu0 0
      %230 = vmatmul.mubr.bf16.gmra.mxu0 %v192
      %v231 = vpop.f32.mrf.mxu0
      %v232 = vadd.f32 0.0, %v231
      %v233 = vpop.f32.mrf.mxu0
      %v234 = vpop.f32.mrf.mxu0
      %v235 = vadd.f32 0.0, %v234
      %v236 = vpop.f32.mrf.mxu0
      %237 = vdwg.mxu0
      %v239 = vlaneseq
      %v240 = vshrl.u32 %v239, 7
      %v241 = vsub.s32 0, %v240
      %v242 = vrot.slane %v181, %v241
      %v244 = vadd.f32 %v242, %v232
      %v245 = vadd.f32 %v242, %v235
      %v246 = vld [vmem:[#allocation6] sm:$0xf]
      %v247 = vld [vmem:[#allocation6 + $0x4] sm:$0xf]
      %v248 = vld [vmem:[#allocation10] sm:$0xf]
      %v251 = vunpack.c.l.b16 %v246
      %v252 = vunpack.c.l.b16 %v247
      %v253 = vpack.c.b16 %v252, %v251
      %v255 = vsel %vm190, %v253, 0
      %v258 = vsel %vm190, %v248, 0
      %260 = vmatprep.subr.bf16.mxu0 0
      %261 = vmatpush1.bf16.xpose.msra.mxu0 0
      %262 = vmatprep.subr.bf16.mxu0 0
      %263 = vmatpush1.bf16.xpose.msra.mxu0 0
      %264 = vmatprep.subr.bf16.mxu0 0
      %265 = vmatpush1.bf16.xpose.msra.mxu0 0
      %266 = vmatprep.subr.bf16.mxu0 0
      %267 = vmatpush1.bf16.xpose.msra.mxu0 0
      %268 = vmatprep.subr.bf16.mxu0 0
      %269 = vmatpush1.bf16.xpose.msra.mxu0 0
      %270 = vmatprep.subr.bf16.mxu0 0
      %271 = vmatpush1.bf16.xpose.msra.mxu0 0
      %272 = vmatprep.subr.bf16.mxu0 0
      %273 = vmatpush1.bf16.xpose.msra.mxu0 0
      %274 = vmatprep.subr.bf16.mxu0 0
      %275 = vmatpush1.bf16.xpose.msra.mxu0 %v258
      %276 = vmatprep.subr.bf16.mxu0 0
      %277 = vmatpush2.bf16.xpose.msra.mxu0 0
      %278 = vmatprep.subr.bf16.mxu0 0
      %279 = vmatpush2.bf16.xpose.msra.mxu0 0
      %280 = vmatprep.subr.bf16.mxu0 0
      %281 = vmatpush2.bf16.xpose.msra.mxu0 0
      %282 = vmatprep.subr.bf16.mxu0 0
      %283 = vmatpush2.bf16.xpose.msra.mxu0 0
      %284 = vmatprep.subr.bf16.mxu0 0
      %285 = vmatpush2.bf16.xpose.msra.mxu0 0
      %286 = vmatprep.subr.bf16.mxu0 0
      %287 = vmatpush2.bf16.xpose.msra.mxu0 0
      %288 = vmatprep.subr.bf16.mxu0 0
      %289 = vmatpush2.bf16.xpose.msra.mxu0 0
      %290 = vmatprep.subr.bf16.mxu0 0
      %291 = vmatpush2.bf16.xpose.msra.mxu0 0
      %292 = vmatprep.mubr.bf16.mxu0 0
      %293 = vmatmul.mubr.bf16.gmra.mxu0 %v255
      %v294 = vpop.f32.mrf.mxu0
      %v295 = vadd.f32 0.0, %v294
      %v296 = vpop.f32.mrf.mxu0
      %v297 = vpop.f32.mrf.mxu0
      %v298 = vadd.f32 0.0, %v297
      %v299 = vpop.f32.mrf.mxu0
      %300 = vdwg.mxu0
      %v301 = vadd.f32 %v244, %v295
      %v302 = vadd.f32 %v245, %v298
      %v303 = vld [vmem:[#allocation7] sm:$0xf]
      %v304 = vld [vmem:[#allocation7 + $0x4] sm:$0xf]
      %v305 = vld [vmem:[%s7] sm:$0xf]
      %v308 = vunpack.c.l.b16 %v303
      %v309 = vunpack.c.l.b16 %v304
      %v310 = vpack.c.b16 %v309, %v308
      %v312 = vsel %vm190, %v310, 0
      %v315 = vsel %vm190, %v305, 0
      %317 = vmatprep.subr.bf16.mxu0 0
      %318 = vmatpush1.bf16.xpose.msra.mxu0 0
      %319 = vmatprep.subr.bf16.mxu0 0
      %320 = vmatpush1.bf16.xpose.msra.mxu0 0
      %321 = vmatprep.subr.bf16.mxu0 0
      %322 = vmatpush1.bf16.xpose.msra.mxu0 0
      %323 = vmatprep.subr.bf16.mxu0 0
      %324 = vmatpush1.bf16.xpose.msra.mxu0 0
      %325 = vmatprep.subr.bf16.mxu0 0
      %326 = vmatpush1.bf16.xpose.msra.mxu0 0
      %327 = vmatprep.subr.bf16.mxu0 0
      %328 = vmatpush1.bf16.xpose.msra.mxu0 0
      %329 = vmatprep.subr.bf16.mxu0 0
      %330 = vmatpush1.bf16.xpose.msra.mxu0 0
      %331 = vmatprep.subr.bf16.mxu0 0
      %332 = vmatpush1.bf16.xpose.msra.mxu0 %v315
      %333 = vmatprep.subr.bf16.mxu0 0
      %334 = vmatpush2.bf16.xpose.msra.mxu0 0
      %335 = vmatprep.subr.bf16.mxu0 0
      %336 = vmatpush2.bf16.xpose.msra.mxu0 0
      %337 = vmatprep.subr.bf16.mxu0 0
      %338 = vmatpush2.bf16.xpose.msra.mxu0 0
      %339 = vmatprep.subr.bf16.mxu0 0
      %340 = vmatpush2.bf16.xpose.msra.mxu0 0
      %341 = vmatprep.subr.bf16.mxu0 0
      %342 = vmatpush2.bf16.xpose.msra.mxu0 0
      %343 = vmatprep.subr.bf16.mxu0 0
      %344 = vmatpush2.bf16.xpose.msra.mxu0 0
      %345 = vmatprep.subr.bf16.mxu0 0
      %346 = vmatpush2.bf16.xpose.msra.mxu0 0
      %347 = vmatprep.subr.bf16.mxu0 0
      %348 = vmatpush2.bf16.xpose.msra.mxu0 0
      %349 = vmatprep.mubr.bf16.mxu0 0
      %350 = vmatmul.mubr.bf16.gmra.mxu0 %v312
      %v351 = vpop.f32.mrf.mxu0
      %v352 = vadd.f32 0.0, %v351
      %v353 = vpop.f32.mrf.mxu0
      %v354 = vpop.f32.mrf.mxu0
      %v355 = vadd.f32 0.0, %v354
      %v356 = vpop.f32.mrf.mxu0
      %357 = vdwg.mxu0
      %v358 = vadd.f32 %v301, %v352
      %v359 = vadd.f32 %v302, %v355
      %v360 = vadd.f32 %v358, %v171
      %v361 = vadd.f32 %v359, %v174
      %vm362 = vcmask 64512
      %363 = vst.msk [vmem:[%s9] sm:$0xff] %vm362, %v360
      %364 = vst.msk [vmem:[%s9 + $0x8] sm:$0xff] %vm362, %v361
    $region65: #{tpu_custom_call.1} parent=1 // pred_fallthru
      _
    %p365 = scmp.gt.s32.totalorder 0, 0
    // Predicated region
    $region66: #{tpu_custom_call.1} parent=1 // pred_check
      %p366 = pneg %p365
    $region67: #{tpu_custom_call.1} parent=1 // pred_check_branch
      %368 = sbr.rel (%p366) target = $region69
    $region68: #{tpu_custom_call.1} parent=1 // pred_region
      %v369 = vld [vmem:[%s9] sm:$0xff]
      %v370 = vld [vmem:[%s9 + $0x8] sm:$0xff]
      %v371 = vadd.f32 %v369, %v171
      %v372 = vadd.f32 %v370, %v174
      %vm373 = vcmask 64512
      %374 = vst.msk [vmem:[%s9] sm:$0xff] %vm373, %v371
      %375 = vst.msk [vmem:[%s9 + $0x8] sm:$0xff] %vm373, %v372
    $region69: #{tpu_custom_call.1} parent=1 // pred_fallthru
      _
    // Predicated region
    $region70: #{tpu_custom_call.1} parent=1 // pred_check
      _
    $region71: #{tpu_custom_call.1} parent=1 // pred_check_branch
      %377 = sbr.rel (0) target = $region73
    $region72: #{tpu_custom_call.1} parent=1 // pred_region
      _
    $region73: #{tpu_custom_call.1} parent=1 // pred_fallthru
      _
    // Predicated region
    $region74: #{tpu_custom_call.1} parent=1 // pred_check
      _
    $region75: #{tpu_custom_call.1} parent=1 // pred_check_branch
      %379 = sbr.rel (0) target = $region77
    $region76: #{tpu_custom_call.1} parent=1 // pred_region
      _
    $region77: #{tpu_custom_call.1} parent=1 // pred_fallthru
      _
    %380 = vsyncpa [#allocation3], 1
    %381 = vsyncpa [#allocation5], 1
    %382 = vsyncpa [#allocation8], 1
    %383 = vsyncpa [#allocation11], 1

</llo_original>
